<compile_context>
chip_gen: v6e
topology: v6e:2x2x1
jax: 0.10.0
libtpu: 0.0.40
codegen_flags: <defaults>
</compile_context>

<pallas_src>
import jax
import jax.numpy as jnp
from jax.experimental import pallas as pl
from jax.experimental.pallas import tpu as pltpu

BN_EPS = 1e-5
HID = 128  # hidden width of fc1/fc2 (fixed by the model)


def _student_kernel(x_ref, w_ref, b_ref, o_ref):
    P, B, d_in = x_ref.shape          # problems per step, rows per problem, input features
    emb = o_ref.shape[-1]
    M = P * B
    inv_b = 1.0 / B                   # static: per-problem batch size known at trace time

    # Unpack resident parameter slabs (DMA'd once for the whole grid).
    w1 = w_ref[0][:d_in, :]           # (d_in, 128)  (zero-padded rows discarded)
    w2 = w_ref[1]                     # (128, 128)
    w3 = w_ref[2][:, :emb]            # (128, emb)
    b1 = b_ref[0:1, :]                # (1, 128)
    b2 = b_ref[1:2, :]                # (1, 128)
    b3 = b_ref[2:3, :emb]             # (1, emb)

    def bn_per_problem(h):
        # h: (M, 128) -> per-problem training-mode BN (gamma=1, beta=0) -> (M, 128)
        h3 = h.reshape(P, B, HID)
        s1 = jnp.sum(h3, axis=1, keepdims=True)
        s2 = jnp.sum(h3 * h3, axis=1, keepdims=True)
        mu = s1 * inv_b
        var = s2 * inv_b - mu * mu    # biased batch variance (training-mode BN)
        scale = jax.lax.rsqrt(var + BN_EPS)
        shift = -mu * scale
        return (h3 * scale + shift).reshape(M, HID)

    x = x_ref[...].reshape(M, d_in)   # stack problems along M for full MXU matmuls

    # ---- fc1 -> sigmoid -> bn1 ----
    h = jnp.dot(x, w1, preferred_element_type=jnp.float32) + b1
    h = bn_per_problem(jax.nn.sigmoid(h))

    # ---- fc2 -> sigmoid -> bn2 ----
    h = jnp.dot(h, w2, preferred_element_type=jnp.float32) + b2
    h = bn_per_problem(jax.nn.sigmoid(h))

    # ---- fc3 -> tanh ----
    y = jnp.dot(h, w3, preferred_element_type=jnp.float32) + b3
    o_ref[...] = jnp.tanh(y).reshape(P, B, emb).astype(o_ref.dtype)


def pack_params(params):
    """Pack raw parameters once into two contiguous, lane-dense slabs."""
    d_in = params["w1"].shape[0]      # embedding_size + num_class
    emb = params["w3"].shape[1]

    w = jnp.zeros((3, HID, HID), jnp.float32)
    w = w.at[0, :d_in, :].set(params["w1"])
    w = w.at[1].set(params["w2"])
    w = w.at[2, :, :emb].set(params["w3"])

    b = jnp.zeros((3, HID), jnp.float32)
    b = b.at[0].set(params["b1"][0])
    b = b.at[1].set(params["b2"][0])
    b = b.at[2, :emb].set(params["b3"][0])

    return dict(w=w, b=b, d_in=d_in, emb=emb)


def _choose_problems_per_step(num_problems, rows_per_problem, target_m=256):
    """Largest divisor of num_problems whose stacked M does not exceed target_m."""
    target_p = max(1, target_m // rows_per_problem)
    best = 1
    for p in range(1, min(num_problems, target_p) + 1):
        if num_problems % p == 0:
            best = p
    return best


def student_forward(x, packed, *, problems_per_step=None):
    """x: (G, B, d_in) or (B, d_in) f32. Returns matching-rank output with last dim = emb.

    Each leading 'problem' is an independent BatchNorm group (its own batch statistics).
    """
    single = x.ndim == 2
    if single:
        x = x[None]                   # (1, B, d_in)
    G, B, d_in = x.shape
    assert d_in == packed["d_in"]
    emb = packed["emb"]

    if problems_per_step is None:
        problems_per_step = _choose_problems_per_step(G, B)
    assert G % problems_per_step == 0
    P = problems_per_step

    out = pl.pallas_call(
        _student_kernel,
        out_shape=jax.ShapeDtypeStruct((G, B, emb), jnp.float32),
        grid=(G // P,),
        in_specs=[
            pl.BlockSpec((P, B, d_in), lambda g: (g, 0, 0)),       # x: streamed per step
            pl.BlockSpec((3, HID, HID), lambda g: (0, 0, 0)),      # weights: resident
            pl.BlockSpec((3, HID), lambda g: (0, 0)),              # biases: resident
        ],
        out_specs=pl.BlockSpec((P, B, emb), lambda g: (g, 0, 0)),
        compiler_params=pltpu.CompilerParams(
            dimension_semantics=("parallel",)),                    # v7x megacore sharding
    )(x, packed["w"], packed["b"])

    return out[0] if single else out


def init_params(key, embedding_size, num_class):
    """Deterministic synthetic parameters (shapes match the PyTorch module)."""
    d_in = embedding_size + num_class
    k = jax.random.split(key, 6)

    def linear(kw, kb, fan_in, fan_out):
        bound = 1.0 / jnp.sqrt(fan_in)
        w = jax.random.uniform(kw, (fan_in, fan_out), jnp.float32, -bound, bound)
        b = jax.random.uniform(kb, (1, fan_out), jnp.float32, -bound, bound)
        return w, b

    w1, b1 = linear(k[0], k[1], d_in, HID)
    w2, b2 = linear(k[2], k[3], HID, HID)
    w3, b3 = linear(k[4], k[5], HID, embedding_size)
    return dict(w1=w1, b1=b1, w2=w2, b2=b2, w3=w3, b3=b3)


def _reference(x, p):
    """Plain-JAX reference for one problem (gamma=1, beta=0 BN, training-mode stats)."""
    def bn(h):
        mu = h.mean(0, keepdims=True)
        var = ((h - mu) ** 2).mean(0, keepdims=True)
        return (h - mu) / jnp.sqrt(var + BN_EPS)

    h = bn(jax.nn.sigmoid(x @ p["w1"] + p["b1"]))
    h = bn(jax.nn.sigmoid(h @ p["w2"] + p["b2"]))
    return jnp.tanh(h @ p["w3"] + p["b3"])


if __name__ == "__main__":
    embedding_size, num_class = 32, 4
    B = 8          # rows per problem (one BatchNorm group)
    G = 8          # independent problems stacked into one pallas_call

    key = jax.random.PRNGKey(0)
    kx, kp = jax.random.split(key)
    x = jax.random.normal(kx, (G, B, embedding_size + num_class), jnp.float32)
    params = init_params(kp, embedding_size, num_class)
    packed = pack_params(params)

    # Multi-problem path: grid of 2 steps, 4 problems (M = 32 rows) per step.
    out = student_forward(x, packed, problems_per_step=4)
    out = jax.block_until_ready(out)
    ref = jax.vmap(lambda xb: _reference(xb, params))(x)
    assert out.shape == (G, B, embedding_size)
    assert jnp.allclose(out, ref, atol=1e-5, rtol=1e-5), "mismatch vs reference (grid)"

    # Single-forward path (matches the original PyTorch call signature).
    out1 = jax.block_until_ready(student_forward(x[0], packed))
    assert out1.shape == (B, embedding_size)
    assert jnp.allclose(out1, ref[0], atol=1e-5, rtol=1e-5), "mismatch vs reference (single)"

    print("KERNEL_OK")
</pallas_src>

<mosaic_0001>
module attributes {stable_mosaic.version = 11 : i64} {
  func.func @_student_kernel(%arg0: i32, %arg1: memref<4x8x36xf32, #tpu.memory_space<vmem>>, %arg2: memref<3x128x128xf32, #tpu.memory_space<vmem>>, %arg3: memref<3x128xf32, #tpu.memory_space<vmem>>, %arg4: memref<4x8x32xf32, #tpu.memory_space<vmem>>) attributes {dimension_semantics = [#tpu.dimension_semantics<parallel>], iteration_bounds = array<i64: 2>, scalar_prefetch = 0 : i64, scratch_operands = 0 : i64, tpu.core_type = #tpu.core_type<tc>, window_params = [{transform_indices = @transform_0, window_bounds = array<i64: 4, 8, 36>}, {pipeline_mode = #tpu.pipeline_mode<synchronous>, transform_indices = @transform_1, window_bounds = array<i64: 3, 128, 128>}, {pipeline_mode = #tpu.pipeline_mode<synchronous>, transform_indices = @transform_2, window_bounds = array<i64: 3, 128>}, {transform_indices = @transform_3, window_bounds = array<i64: 4, 8, 32>}]} {
    %c0 = arith.constant 0 : index
    %c0_0 = arith.constant 0 : index
    %c0_1 = arith.constant 0 : index
    %0 = vector.load %arg2[%c0, %c0_0, %c0_1] : memref<3x128x128xf32, #tpu.memory_space<vmem>>, vector<1x128x128xf32>
    %1 = vector.shape_cast %0 : vector<1x128x128xf32> to vector<128x128xf32>
    %2 = vector.extract_strided_slice %1 {offsets = [0, 0], sizes = [36, 128], strides = [1, 1]} : vector<128x128xf32> to vector<36x128xf32>
    %c1 = arith.constant 1 : index
    %c0_2 = arith.constant 0 : index
    %c0_3 = arith.constant 0 : index
    %3 = vector.load %arg2[%c1, %c0_2, %c0_3] : memref<3x128x128xf32, #tpu.memory_space<vmem>>, vector<1x128x128xf32>
    %4 = vector.shape_cast %3 : vector<1x128x128xf32> to vector<128x128xf32>
    %c2 = arith.constant 2 : index
    %c0_4 = arith.constant 0 : index
    %c0_5 = arith.constant 0 : index
    %5 = vector.load %arg2[%c2, %c0_4, %c0_5] : memref<3x128x128xf32, #tpu.memory_space<vmem>>, vector<1x128x128xf32>
    %6 = vector.shape_cast %5 : vector<1x128x128xf32> to vector<128x128xf32>
    %7 = vector.extract_strided_slice %6 {offsets = [0, 0], sizes = [128, 32], strides = [1, 1]} : vector<128x128xf32> to vector<128x32xf32>
    %c0_6 = arith.constant 0 : index
    %c0_7 = arith.constant 0 : index
    %8 = vector.load %arg3[%c0_6, %c0_7] : memref<3x128xf32, #tpu.memory_space<vmem>>, vector<1x128xf32>
    %c1_8 = arith.constant 1 : index
    %c0_9 = arith.constant 0 : index
    %9 = vector.load %arg3[%c1_8, %c0_9] : memref<3x128xf32, #tpu.memory_space<vmem>>, vector<1x128xf32>
    %c2_10 = arith.constant 2 : index
    %c0_11 = arith.constant 0 : index
    %10 = vector.load %arg3[%c2_10, %c0_11] : memref<3x128xf32, #tpu.memory_space<vmem>>, vector<1x32xf32>
    %c0_12 = arith.constant 0 : index
    %c0_13 = arith.constant 0 : index
    %c0_14 = arith.constant 0 : index
    %11 = vector.load %arg1[%c0_12, %c0_13, %c0_14] : memref<4x8x36xf32, #tpu.memory_space<vmem>>, vector<4x8x36xf32>
    %12 = vector.shape_cast %11 : vector<4x8x36xf32> to vector<32x36xf32>
    %cst = arith.constant dense<0.000000e+00> : vector<32x128xf32>
    %13 = tpu.matmul %12, %2, %cst {dimension_numbers = #tpu.dot_dimension_numbers<[1], [0], [0], [1], [0, 0, 1, 1], [], []>} : vector<32x36xf32>, vector<36x128xf32>, vector<32x128xf32> -> vector<32x128xf32>
    %14 = vector.broadcast %8 : vector<1x128xf32> to vector<32x128xf32>
    %15 = arith.addf %13, %14 : vector<32x128xf32>
    %16 = arith.negf %15 : vector<32x128xf32>
    %17 = math.exp %16 : vector<32x128xf32>
    %cst_15 = arith.constant 1.000000e+00 : f32
    %18 = vector.broadcast %cst_15 : f32 to vector<32x128xf32>
    %19 = arith.addf %18, %17 : vector<32x128xf32>
    %20 = arith.divf %18, %19 : vector<32x128xf32>
    %21 = vector.shape_cast %20 : vector<32x128xf32> to vector<4x8x128xf32>
    %cst_16 = arith.constant dense<0.000000e+00> : vector<4x128xf32>
    %22 = vector.multi_reduction <add>, %21, %cst_16 [1] : vector<4x8x128xf32> to vector<4x128xf32>
    %23 = vector.shape_cast %22 : vector<4x128xf32> to vector<4x1x128xf32>
    %24 = arith.mulf %21, %21 : vector<4x8x128xf32>
    %cst_17 = arith.constant dense<0.000000e+00> : vector<4x128xf32>
    %25 = vector.multi_reduction <add>, %24, %cst_17 [1] : vector<4x8x128xf32> to vector<4x128xf32>
    %26 = vector.shape_cast %25 : vector<4x128xf32> to vector<4x1x128xf32>
    %cst_18 = arith.constant 1.250000e-01 : f32
    %27 = vector.broadcast %cst_18 : f32 to vector<4x1x128xf32>
    %28 = arith.mulf %23, %27 : vector<4x1x128xf32>
    %cst_19 = arith.constant 1.250000e-01 : f32
    %29 = vector.broadcast %cst_19 : f32 to vector<4x1x128xf32>
    %30 = arith.mulf %26, %29 : vector<4x1x128xf32>
    %31 = arith.mulf %28, %28 : vector<4x1x128xf32>
    %32 = arith.subf %30, %31 : vector<4x1x128xf32>
    %cst_20 = arith.constant 9.99999974E-6 : f32
    %33 = vector.broadcast %cst_20 : f32 to vector<4x1x128xf32>
    %34 = arith.addf %32, %33 : vector<4x1x128xf32>
    %35 = math.rsqrt %34 : vector<4x1x128xf32>
    %cst_21 = arith.constant 0.000000e+00 : f32
    %36 = vector.broadcast %cst_21 : f32 to vector<4x1x128xf32>
    %37 = arith.subf %36, %28 : vector<4x1x128xf32>
    %38 = arith.mulf %37, %35 : vector<4x1x128xf32>
    %39 = vector.broadcast %35 : vector<4x1x128xf32> to vector<4x8x128xf32>
    %40 = arith.mulf %21, %39 : vector<4x8x128xf32>
    %41 = vector.broadcast %38 : vector<4x1x128xf32> to vector<4x8x128xf32>
    %42 = arith.addf %40, %41 : vector<4x8x128xf32>
    %43 = vector.shape_cast %42 : vector<4x8x128xf32> to vector<32x128xf32>
    %cst_22 = arith.constant dense<0.000000e+00> : vector<32x128xf32>
    %44 = tpu.matmul %43, %4, %cst_22 {dimension_numbers = #tpu.dot_dimension_numbers<[1], [0], [0], [1], [0, 0, 1, 1], [], []>} : vector<32x128xf32>, vector<128x128xf32>, vector<32x128xf32> -> vector<32x128xf32>
    %45 = vector.broadcast %9 : vector<1x128xf32> to vector<32x128xf32>
    %46 = arith.addf %44, %45 : vector<32x128xf32>
    %47 = arith.negf %46 : vector<32x128xf32>
    %48 = math.exp %47 : vector<32x128xf32>
    %cst_23 = arith.constant 1.000000e+00 : f32
    %49 = vector.broadcast %cst_23 : f32 to vector<32x128xf32>
    %50 = arith.addf %49, %48 : vector<32x128xf32>
    %51 = arith.divf %49, %50 : vector<32x128xf32>
    %52 = vector.shape_cast %51 : vector<32x128xf32> to vector<4x8x128xf32>
    %cst_24 = arith.constant dense<0.000000e+00> : vector<4x128xf32>
    %53 = vector.multi_reduction <add>, %52, %cst_24 [1] : vector<4x8x128xf32> to vector<4x128xf32>
    %54 = vector.shape_cast %53 : vector<4x128xf32> to vector<4x1x128xf32>
    %55 = arith.mulf %52, %52 : vector<4x8x128xf32>
    %cst_25 = arith.constant dense<0.000000e+00> : vector<4x128xf32>
    %56 = vector.multi_reduction <add>, %55, %cst_25 [1] : vector<4x8x128xf32> to vector<4x128xf32>
    %57 = vector.shape_cast %56 : vector<4x128xf32> to vector<4x1x128xf32>
    %cst_26 = arith.constant 1.250000e-01 : f32
    %58 = vector.broadcast %cst_26 : f32 to vector<4x1x128xf32>
    %59 = arith.mulf %54, %58 : vector<4x1x128xf32>
    %cst_27 = arith.constant 1.250000e-01 : f32
    %60 = vector.broadcast %cst_27 : f32 to vector<4x1x128xf32>
    %61 = arith.mulf %57, %60 : vector<4x1x128xf32>
    %62 = arith.mulf %59, %59 : vector<4x1x128xf32>
    %63 = arith.subf %61, %62 : vector<4x1x128xf32>
    %cst_28 = arith.constant 9.99999974E-6 : f32
    %64 = vector.broadcast %cst_28 : f32 to vector<4x1x128xf32>
    %65 = arith.addf %63, %64 : vector<4x1x128xf32>
    %66 = math.rsqrt %65 : vector<4x1x128xf32>
    %cst_29 = arith.constant 0.000000e+00 : f32
    %67 = vector.broadcast %cst_29 : f32 to vector<4x1x128xf32>
    %68 = arith.subf %67, %59 : vector<4x1x128xf32>
    %69 = arith.mulf %68, %66 : vector<4x1x128xf32>
    %70 = vector.broadcast %66 : vector<4x1x128xf32> to vector<4x8x128xf32>
    %71 = arith.mulf %52, %70 : vector<4x8x128xf32>
    %72 = vector.broadcast %69 : vector<4x1x128xf32> to vector<4x8x128xf32>
    %73 = arith.addf %71, %72 : vector<4x8x128xf32>
    %74 = vector.shape_cast %73 : vector<4x8x128xf32> to vector<32x128xf32>
    %cst_30 = arith.constant dense<0.000000e+00> : vector<32x32xf32>
    %75 = tpu.matmul %74, %7, %cst_30 {dimension_numbers = #tpu.dot_dimension_numbers<[1], [0], [0], [1], [0, 0, 1, 1], [], []>} : vector<32x128xf32>, vector<128x32xf32>, vector<32x32xf32> -> vector<32x32xf32>
    %76 = vector.broadcast %10 : vector<1x32xf32> to vector<32x32xf32>
    %77 = arith.addf %75, %76 : vector<32x32xf32>
    %78 = math.tanh %77 : vector<32x32xf32>
    %79 = vector.shape_cast %78 : vector<32x32xf32> to vector<4x8x32xf32>
    %c0_31 = arith.constant 0 : index
    %c0_32 = arith.constant 0 : index
    %c0_33 = arith.constant 0 : index
    %80 = vector.load %arg4[%c0_31, %c0_32, %c0_33] : memref<4x8x32xf32, #tpu.memory_space<vmem>>, vector<4x8x32xf32>
    tpu.vector_store %arg4[%c0_31, %c0_32, %c0_33], %79 {strides = array<i32>} : memref<4x8x32xf32, #tpu.memory_space<vmem>>, vector<4x8x32xf32>,
    return
  }
  func.func @transform_0(%arg0: i32) -> (i32, i32, i32) {
    %c0_i32 = arith.constant 0 : i32
    %c0_i32_0 = arith.constant 0 : i32
    %c0_i32_1 = arith.constant 0 : i32
    return %arg0, %c0_i32, %c0_i32_0 : i32, i32, i32
  }
  func.func @transform_1(%arg0: i32) -> (i32, i32, i32) {
    %c0_i32 = arith.constant 0 : i32
    %c0_i32_0 = arith.constant 0 : i32
    %c0_i32_1 = arith.constant 0 : i32
    %c0_i32_2 = arith.constant 0 : i32
    return %c0_i32, %c0_i32_0, %c0_i32_1 : i32, i32, i32
  }
  func.func @transform_2(%arg0: i32) -> (i32, i32) {
    %c0_i32 = arith.constant 0 : i32
    %c0_i32_0 = arith.constant 0 : i32
    %c0_i32_1 = arith.constant 0 : i32
    return %c0_i32, %c0_i32_0 : i32, i32
  }
  func.func @transform_3(%arg0: i32) -> (i32, i32, i32) {
    %c0_i32 = arith.constant 0 : i32
    %c0_i32_0 = arith.constant 0 : i32
    %c0_i32_1 = arith.constant 0 : i32
    return %arg0, %c0_i32, %c0_i32_0 : i32, i32, i32
  }
}

</mosaic_0001>

<llo_original>
// kernel: tpu_custom_call.1
$region0: #{tpu_custom_call.1}
  #allocation0 [shape = 'u32[]', space=smem, size = 0x4, offset = 0x4, fixed_abs, tag = 'smem constant byte address 0x4 - core index']
  #allocation1 [shape = 'u32[144,128]{1,0:T(1,128)}', space=vmem, size = 0x12000, scoped, tag = 'internal scratch']
  %s0 = inlined_call_operand.hbm [shape: f32[8,8,36], index: 0, kind: input, shape index: {}]
  %s1 = inlined_call_operand.hbm [shape: f32[3,128,128], index: 1, kind: input, shape index: {}]
  %s2 = inlined_call_operand.hbm [shape: f32[3,128], index: 2, kind: input, shape index: {}]
  %s3 = inlined_call_operand.hbm [shape: f32[8,8,32], index: 3, kind: output, shape index: {}]
  %s4 = sld [smem:[#allocation0]]
  $region57: #{tpu_custom_call.1} parent=0
    _
  %s6 = ssub.s32 1, %s4
  %s7 = scalar_select 0, %s6, %s4
  $region1: #{tpu_custom_call.1} parent=0
    #allocation2 [shape = 'u8[32768]{0}', space=vmem, size = 0x8000, scoped, tag = 'input window, operand 0']
    #allocation3 [shape = 's32[2]{0}', space=sflag, size = 0x8, scoped, tag = 'scoped memory for tpu_custom_call.1']
    #allocation4 [shape = 's32[2]{0}', space=sflag, size = 0x8, scoped, tag = 'scoped memory for tpu_custom_call.1']
    #allocation5 [shape = 'u8[196608]{0}', space=vmem, size = 0x30000, scoped, tag = 'input window, operand 1, single buffered']
    #allocation6 [shape = 's32[1]{0}', space=sflag, size = 0x4, scoped, tag = 'scoped memory for tpu_custom_call.1']
    #allocation7 [shape = 'u8[2048]{0}', space=vmem, size = 0x800, scoped, tag = 'input window, operand 2, single buffered']
    #allocation8 [shape = 'u8[32768]{0}', space=vmem, size = 0x8000, scoped, tag = 'output window, operand 0']
    %8 = vsyncpa [#allocation3], 0
    %s9 = scalar_lea.sflag [#allocation3], 1
    %10 = vsyncpa %s9, 0
    %11 = vsyncpa [#allocation6], 0
    %12 = vsyncpa [#allocation4], 0
    %s13 = scalar_lea.sflag [#allocation4], 1
    %14 = vsyncpa %s13, 0
    loop: start=0, step=1, limit=4
    $region2: #{tpu_custom_call.1} parent=1 // loop_pre_header
      _
    $region3: #{tpu_custom_call.1} parent=1 // loop_header
      %s16 = sphi 0, %s20
      %p17 = scmp.ge.s32.totalorder %s16, 4
      %s26 = sphi 0, %s28
      %s29 = sphi 0, %s26
      %s30 = sphi 0, %s29
      %s46 = sphi 0, %s30
      %s50 = sphi 0, %s50
      %s52 = sphi 0, %s50
      %s53 = sphi 0, %s52
      %s67 = sphi 0, %s53
      %s71 = sphi 0, %s71
      %s73 = sphi 0, %s71
      %s74 = sphi 0, %s73
      %s88 = sphi 0, %s74
      %s94 = sphi 0, %s96
      %s97 = sphi 0, %s94
      %s98 = sphi 0, %s97
      %s114 = sphi 0, %s98
    $region4: #{tpu_custom_call.1} parent=1 // loop_header_branch
      %19 = sbr.rel (%p17) target = $region8
    $region5: #{tpu_custom_call.1} parent=1 // loop_body
      %s21 = ssub.s32 %s16, 1
      %s22 = ssub.s32 %s16, 2
      %s23 = sadd.s32 %s16, 1
      %s24 = ssub.s32 %s16, %s23
      %p25 = scmp.eq.s32.totalorder %s24, 0
      %s27 = sadd.s32 %s26, 1
      %s28 = scalar_select %p25, %s26, %s27
      %p31 = pneg %p25
      %p32 = scmp.eq.s32.totalorder %s16, 1
      %p33 = por %p31, %p32
      %p34 = scmp.ne.s32.totalorder %s26, %s29
      %p35 = scmp.eq.s32.totalorder %s16, 0
      %p36 = por %p34, %p35
      %p37 = scmp.ne.s32.totalorder %s26, %s29
      %p38 = scmp.eq.s32.totalorder %s21, 1
      %p39 = por %p37, %p38
      %p40 = scmp.ne.s32.totalorder %s29, %s30
      %p41 = scmp.eq.s32.totalorder %s21, 0
      %p42 = por %p40, %p41
      %p43 = scmp.ne.s32.totalorder %s29, %s30
      %p44 = scmp.eq.s32.totalorder %s22, 1
      %p45 = por %p43, %p44
      %p47 = scmp.ne.s32.totalorder %s30, %s46
      %p48 = scmp.eq.s32.totalorder %s22, 0
      %p49 = por %p47, %p48
      %s51 = sadd.s32 %s50, 1
      %p54 = scmp.eq.s32.totalorder %s16, 1
      %p55 = scmp.ne.s32.totalorder %s50, %s52
      %p56 = scmp.eq.s32.totalorder %s16, 0
      %p57 = por %p55, %p56
      %p58 = scmp.ne.s32.totalorder %s50, %s52
      %p59 = scmp.eq.s32.totalorder %s21, 1
      %p60 = por %p58, %p59
      %p61 = scmp.ne.s32.totalorder %s52, %s53
      %p62 = scmp.eq.s32.totalorder %s21, 0
      %p63 = por %p61, %p62
      %p64 = scmp.ne.s32.totalorder %s52, %s53
      %p65 = scmp.eq.s32.totalorder %s22, 1
      %p66 = por %p64, %p65
      %p68 = scmp.ne.s32.totalorder %s53, %s67
      %p69 = scmp.eq.s32.totalorder %s22, 0
      %p70 = por %p68, %p69
      %s72 = sadd.s32 %s71, 1
      %p75 = scmp.eq.s32.totalorder %s16, 1
      %p76 = scmp.ne.s32.totalorder %s71, %s73
      %p77 = scmp.eq.s32.totalorder %s16, 0
      %p78 = por %p76, %p77
      %p79 = scmp.ne.s32.totalorder %s71, %s73
      %p80 = scmp.eq.s32.totalorder %s21, 1
      %p81 = por %p79, %p80
      %p82 = scmp.ne.s32.totalorder %s73, %s74
      %p83 = scmp.eq.s32.totalorder %s21, 0
      %p84 = por %p82, %p83
      %p85 = scmp.ne.s32.totalorder %s73, %s74
      %p86 = scmp.eq.s32.totalorder %s22, 1
      %p87 = por %p85, %p86
      %p89 = scmp.ne.s32.totalorder %s74, %s88
      %p90 = scmp.eq.s32.totalorder %s22, 0
      %p91 = por %p89, %p90
      %s92 = ssub.s32 %s16, %s23
      %p93 = scmp.eq.s32.totalorder %s92, 0
      %s95 = sadd.s32 %s94, 1
      %s96 = scalar_select %p93, %s94, %s95
      %p99 = pneg %p93
      %p100 = scmp.eq.s32.totalorder %s16, 1
      %p101 = por %p99, %p100
      %p102 = scmp.ne.s32.totalorder %s94, %s97
      %p103 = scmp.eq.s32.totalorder %s16, 0
      %p104 = por %p102, %p103
      %p105 = scmp.ne.s32.totalorder %s94, %s97
      %p106 = scmp.eq.s32.totalorder %s21, 1
      %p107 = por %p105, %p106
      %p108 = scmp.ne.s32.totalorder %s97, %s98
      %p109 = scmp.eq.s32.totalorder %s21, 0
      %p110 = por %p108, %p109
      %p111 = scmp.ne.s32.totalorder %s97, %s98
      %p112 = scmp.eq.s32.totalorder %s22, 1
      %p113 = por %p111, %p112
      %p115 = scmp.ne.s32.totalorder %s98, %s114
      %p116 = scmp.eq.s32.totalorder %s22, 0
      %p117 = por %p115, %p116
      %p118 = scmp.le.s32.totalorder 1, %s16
      %p119 = scmp.lt.s32.totalorder %s16, 3
      %p120 = pnand %p118, %p119
      %p121 = pneg %p120
      // Predicated region
      $region9: #{tpu_custom_call.1} parent=5 // pred_check
        _
      $region10: #{tpu_custom_call.1} parent=5 // pred_check_branch
        %123 = sbr.rel (%p120) target = $region12
      $region11: #{tpu_custom_call.1} parent=5 // pred_region
        %s124 = ssub.s32 %s16, 1
        // Predicated region
        $region13: #{tpu_custom_call.1} parent=11 // pred_check
          %p125 = pneg %p63
        $region14: #{tpu_custom_call.1} parent=11 // pred_check_branch
          %127 = sbr.rel (%p125) target = $region16
        $region15: #{tpu_custom_call.1} parent=11 // pred_region
          %s129 = ssub.s32 6144, 6144
          %130 = vsyncadd [#allocation6], %s129
          %s131 = sshll.u32 [#allocation5], 4
          %s132 = int_to_ptr.vmem [resolvable:$true] %s131
          %137 = dma.hbm_to_vmem [thread:$0]  %s1, 6144, %s132, [#allocation6], 128, 128, 8
        $region16: #{tpu_custom_call.1} parent=11 // pred_fallthru
          _
        // Predicated region
        $region17: #{tpu_custom_call.1} parent=11 // pred_check
          %p138 = pneg %p84
        $region18: #{tpu_custom_call.1} parent=11 // pred_check_branch
          %140 = sbr.rel (%p138) target = $region20
        $region19: #{tpu_custom_call.1} parent=11 // pred_region
          %s142 = ssub.s32 64, 64
          %143 = vsyncadd [#allocation6], %s142
          %s145 = sshll.u32 [#allocation7], 4
          %s146 = int_to_ptr.vmem [resolvable:$true] %s145
          %148 = dma.hbm_to_vmem [thread:$0]  %s2, 64, %s146, [#allocation6]
        $region20: #{tpu_custom_call.1} parent=11 // pred_fallthru
          _
      $region12: #{tpu_custom_call.1} parent=5 // pred_fallthru
        _
      %p149 = scmp.lt.s32.totalorder %s16, 2
      // Predicated region
      $region21: #{tpu_custom_call.1} parent=5 // pred_check
        %p150 = pneg %p149
      $region22: #{tpu_custom_call.1} parent=5 // pred_check_branch
        %152 = sbr.rel (%p150) target = $region24
      $region23: #{tpu_custom_call.1} parent=5 // pred_region
        // Predicated region
        $region25: #{tpu_custom_call.1} parent=23 // pred_check
          %p153 = pneg %p36
        $region26: #{tpu_custom_call.1} parent=23 // pred_check_branch
          %155 = sbr.rel (%p153) target = $region28
        $region27: #{tpu_custom_call.1} parent=23 // pred_region
          %s156 = sand.u32 %s26, 1
          %s157 = scalar_lea.sflag [#allocation3], %s156
          %s158 = sand.u32 %s26, 1
          %s159 = smul.addr %s158, 32
          %s160 = scalar_lea.vmem [#allocation2], %s159
          %s161 = smul.u32 4, %s16
          %s163 = ssub.s32 512, 512
          %164 = vsyncadd %s157, %s163
          %s165 = smul.addr %s161, 128
          %s166 = scalar_lea.hbm %s0, %s165
          %s167 = sshll.u32 %s160, 4
          %s168 = int_to_ptr.vmem [resolvable:$true] %s167
          %173 = dma.hbm_to_vmem [thread:$0]  %s166, 512, %s168, %s157, 128, 128, 8
        $region28: #{tpu_custom_call.1} parent=23 // pred_fallthru
          _
      $region24: #{tpu_custom_call.1} parent=5 // pred_fallthru
        _
      %p174 = scmp.le.s32.totalorder 1, %s16
      %p175 = scmp.lt.s32.totalorder %s16, 3
      %p176 = pnand %p174, %p175
      %p177 = pneg %p176
      // Predicated region
      $region29: #{tpu_custom_call.1} parent=5 // pred_check
        _
      $region30: #{tpu_custom_call.1} parent=5 // pred_check_branch
        %179 = sbr.rel (%p176) target = $region32
      $region31: #{tpu_custom_call.1} parent=5 // pred_region
        %s180 = ssub.s32 %s16, 1
        %s181 = sand.u32 %s29, 1
        %s182 = scalar_lea.sflag [#allocation3], %s181
        %s183 = sand.u32 %s29, 1
        %s184 = smul.addr %s183, 32
        %s185 = scalar_lea.vmem [#allocation2], %s184
        // Predicated region
        $region33: #{tpu_custom_call.1} parent=31 // pred_check
          %p186 = pneg %p42
        $region34: #{tpu_custom_call.1} parent=31 // pred_check_branch
          %188 = sbr.rel (%p186) target = $region36
        $region35: #{tpu_custom_call.1} parent=31 // pred_region
          %189 = dma.done %s182, 512
        $region36: #{tpu_custom_call.1} parent=31 // pred_fallthru
          _
        // Predicated region
        $region37: #{tpu_custom_call.1} parent=31 // pred_check
          %p190 = pneg %p63
        $region38: #{tpu_custom_call.1} parent=31 // pred_check_branch
          %192 = sbr.rel (%p190) target = $region40
        $region39: #{tpu_custom_call.1} parent=31 // pred_region
          %193 = dma.done [#allocation6], 6144
        $region40: #{tpu_custom_call.1} parent=31 // pred_fallthru
          _
        // Predicated region
        $region41: #{tpu_custom_call.1} parent=31 // pred_check
          %p194 = pneg %p84
        $region42: #{tpu_custom_call.1} parent=31 // pred_check_branch
          %196 = sbr.rel (%p194) target = $region44
        $region43: #{tpu_custom_call.1} parent=31 // pred_region
          %197 = dma.done [#allocation6], 64
        $region44: #{tpu_custom_call.1} parent=31 // pred_fallthru
          _
        %s198 = sand.u32 %s29, 1
        %s199 = scalar_lea.sflag [#allocation3], %s198
        %s200 = sand.u32 %s29, 1
        %s201 = smul.addr %s200, 32
        %s202 = scalar_lea.vmem [#allocation2], %s201
        %p203 = pneg %p42
        %p204 = pneg %p39
        %p205 = pneg %p63
        %p206 = pneg %p60
        %p207 = pneg %p84
        %p208 = pneg %p81
        %p209 = pneg %p110
        %p210 = pneg %p107
        %s211 = sand.u32 %s97, 1
        %s212 = scalar_lea.sflag [#allocation4], %s211
        %s213 = sand.u32 %s97, 1
        %s214 = smul.addr %s213, 32
        %s215 = scalar_lea.vmem [#allocation8], %s214
        %s216 = smul.u32 4, %s21
        %s217 = smul.u32 4, %s21
        %v218 = vld [vmem:[#allocation5] sm:$0xff]
        %v219 = vld [vmem:[#allocation5 + $0x8] sm:$0xff]
        %v220 = vld [vmem:[#allocation5 + $0x10] sm:$0xff]
        %v221 = vld [vmem:[#allocation5 + $0x18] sm:$0xff]
        %v222 = vld [vmem:[#allocation5 + $0x20] sm:$0xff]
        %s223 = scalar_lea.vmem [#allocation5], 128
        %v224 = vld [vmem:[%s223] sm:$0xff]
        %v225 = vld [vmem:[%s223 + $0x8] sm:$0xff]
        %v226 = vld [vmem:[%s223 + $0x10] sm:$0xff]
        %v227 = vld [vmem:[%s223 + $0x18] sm:$0xff]
        %v228 = vld [vmem:[%s223 + $0x20] sm:$0xff]
        %v229 = vld [vmem:[%s223 + $0x28] sm:$0xff]
        %v230 = vld [vmem:[%s223 + $0x30] sm:$0xff]
        %v231 = vld [vmem:[%s223 + $0x38] sm:$0xff]
        %v232 = vld [vmem:[%s223 + $0x40] sm:$0xff]
        %v233 = vld [vmem:[%s223 + $0x48] sm:$0xff]
        %v234 = vld [vmem:[%s223 + $0x50] sm:$0xff]
        %v235 = vld [vmem:[%s223 + $0x58] sm:$0xff]
        %v236 = vld [vmem:[%s223 + $0x60] sm:$0xff]
        %v237 = vld [vmem:[%s223 + $0x68] sm:$0xff]
        %v238 = vld [vmem:[%s223 + $0x70] sm:$0xff]
        %v239 = vld [vmem:[%s223 + $0x78] sm:$0xff]
        %s240 = scalar_lea.vmem [#allocation5], 256
        %v241 = vld [vmem:[%s240] sm:$0xff]
        %v242 = vld [vmem:[%s240 + $0x8] sm:$0xff]
        %v243 = vld [vmem:[%s240 + $0x10] sm:$0xff]
        %v244 = vld [vmem:[%s240 + $0x18] sm:$0xff]
        %v245 = vld [vmem:[%s240 + $0x20] sm:$0xff]
        %v246 = vld [vmem:[%s240 + $0x28] sm:$0xff]
        %v247 = vld [vmem:[%s240 + $0x30] sm:$0xff]
        %v248 = vld [vmem:[%s240 + $0x38] sm:$0xff]
        %v249 = vld [vmem:[%s240 + $0x40] sm:$0xff]
        %v250 = vld [vmem:[%s240 + $0x48] sm:$0xff]
        %v251 = vld [vmem:[%s240 + $0x50] sm:$0xff]
        %v252 = vld [vmem:[%s240 + $0x58] sm:$0xff]
        %v253 = vld [vmem:[%s240 + $0x60] sm:$0xff]
        %v254 = vld [vmem:[%s240 + $0x68] sm:$0xff]
        %v255 = vld [vmem:[%s240 + $0x70] sm:$0xff]
        %v256 = vld [vmem:[%s240 + $0x78] sm:$0xff]
        %v257 = vld [vmem:[#allocation7] sm:$0x1]
        %v258 = vld [vmem:[#allocation7 + $0x1] sm:$0x1]
        %v259 = vld [vmem:[#allocation7 + $0x2] sm:$0x1]
        %v260 = vld [vmem:[%s185] sm:$0xff]
        %v261 = vld [vmem:[%s185 + $0x8] sm:$0xff]
        %v262 = vld [vmem:[%s185 + $0x10] sm:$0xff]
        %v263 = vld [vmem:[%s185 + $0x18] sm:$0xff]
        %v264 = vlaneseq
        %v265 = vshrl.u32 %v264, 7
        %v266 = vsub.s32 0, %v265
        %v267 = vrot.slane %v257, %v266
        %vm268 = vcmask 293888
        %v270 = vsel %vm268, %v260, 0
        %v273 = vsel %vm268, %v261, 0
        %v276 = vsel %vm268, %v262, 0
        %v279 = vsel %vm268, %v263, 0
        %vm281 = vcmask 1043456
        %v283 = vsel %vm281, %v222, 0
        %285 = vmatprep.subr.mxu0 0.0
        %286 = vmatpush1.msra.mxu0 0.0
        %287 = vmatprep.subr.mxu0 0.0
        %288 = vmatpush1.msra.mxu0 0.0
        %289 = vmatprep.subr.mxu0 0.0
        %290 = vmatpush1.msra.mxu0 0.0
        %291 = vmatprep.subr.mxu0 0.0
        %292 = vmatpush1.msra.mxu0 0.0
        %293 = vmatprep.subr.mxu0 0.0
        %294 = vmatpush1.msra.mxu0 0.0
        %295 = vmatprep.subr.mxu0 0.0
        %296 = vmatpush1.msra.mxu0 0.0
        %297 = vmatprep.subr.mxu0 0.0
        %298 = vmatpush1.msra.mxu0 0.0
        %299 = vmatprep.subr.mxu0 0.0
        %300 = vmatpush1.msra.mxu0 0.0
        %301 = vmatprep.subr.mxu0 0.0
        %302 = vmatpush1.msra.mxu0 0.0
        %303 = vmatprep.subr.mxu0 0.0
        %304 = vmatpush1.msra.mxu0 0.0
        %305 = vmatprep.subr.mxu0 0.0
        %306 = vmatpush1.msra.mxu0 0.0
        %307 = vmatprep.subr.mxu0 0.0
        %308 = vmatpush1.msra.mxu0 %v283
        %309 = vmatprep.subr.mxu0 0.0
        %310 = vmatpush1.msra.mxu0 %v221
        %311 = vmatprep.subr.mxu0 0.0
        %312 = vmatpush1.msra.mxu0 %v220
        %313 = vmatprep.subr.mxu0 0.0
        %314 = vmatpush1.msra.mxu0 %v219
        %315 = vmatprep.subr.mxu0 0.0
        %316 = vmatpush1.msra.mxu0 %v218
        %317 = vmatprep.subr.mxu0 0.0
        %318 = vmatpush2.msra.mxu0 0.0
        %319 = vmatprep.subr.mxu0 0.0
        %320 = vmatpush2.msra.mxu0 0.0
        %321 = vmatprep.subr.mxu0 0.0
        %322 = vmatpush2.msra.mxu0 0.0
        %323 = vmatprep.subr.mxu0 0.0
        %324 = vmatpush2.msra.mxu0 0.0
        %325 = vmatprep.subr.mxu0 0.0
        %326 = vmatpush2.msra.mxu0 0.0
        %327 = vmatprep.subr.mxu0 0.0
        %328 = vmatpush2.msra.mxu0 0.0
        %329 = vmatprep.subr.mxu0 0.0
        %330 = vmatpush2.msra.mxu0 0.0
        %331 = vmatprep.subr.mxu0 0.0
        %332 = vmatpush2.msra.mxu0 0.0
        %333 = vmatprep.subr.mxu0 0.0
        %334 = vmatpush2.msra.mxu0 0.0
        %335 = vmatprep.subr.mxu0 0.0
        %336 = vmatpush2.msra.mxu0 0.0
        %337 = vmatprep.subr.mxu0 0.0
        %338 = vmatpush2.msra.mxu0 0.0
        %339 = vmatprep.subr.mxu0 0.0
        %340 = vmatpush2.msra.mxu0 0.0
        %341 = vmatprep.subr.mxu0 0.0
        %342 = vmatpush2.msra.mxu0 0.0
        %343 = vmatprep.subr.mxu0 0.0
        %344 = vmatpush2.msra.mxu0 0.0
        %345 = vmatprep.subr.mxu0 0.0
        %346 = vmatpush2.msra.mxu0 0.0
        %347 = vmatprep.subr.mxu0 0.0
        %348 = vmatpush2.msra.mxu0 0.0
        %349 = vmatprep.mubr.f32.mxu0 0.0
        %350 = vmatmul.mubr.f32.gmra.mxu0 %v270
        %v351 = vpop.f32.mrf.mxu0
        %v352 = vadd.f32 %v267, %v351
        %v353 = vpop.f32.mrf.mxu0
        %354 = vmatprep.mubr.f32.mxu0 0.0
        %355 = vmatmul.mubr.f32.gmra.mxu0 %v273
        %v356 = vpop.f32.mrf.mxu0
        %v357 = vadd.f32 %v267, %v356
        %v358 = vpop.f32.mrf.mxu0
        %359 = vmatprep.mubr.f32.mxu0 0.0
        %360 = vmatmul.mubr.f32.gmra.mxu0 %v276
        %v361 = vpop.f32.mrf.mxu0
        %v362 = vadd.f32 %v267, %v361
        %v363 = vpop.f32.mrf.mxu0
        %364 = vmatprep.mubr.f32.mxu0 0.0
        %365 = vmatmul.mubr.f32.gmra.mxu0 %v279
        %v366 = vpop.f32.mrf.mxu0
        %v367 = vadd.f32 %v267, %v366
        %v368 = vpop.f32.mrf.mxu0
        %369 = vdwg.mxu0
        %v370 = vxor.u32 %v352, 2147483648
        %v371 = vxor.u32 %v357, 2147483648
        %v372 = vxor.u32 %v362, 2147483648
        %v373 = vxor.u32 %v367, 2147483648
        %v374 = vmul.f32 %v370, 1.442695
        %v375 = vpow.pop %v374
        %v376 = vmul.f32 %v371, 1.442695
        %v377 = vpow.pop %v376
        %v378 = vmul.f32 %v372, 1.442695
        %v379 = vpow.pop %v378
        %v380 = vmul.f32 %v373, 1.442695
        %v381 = vpow.pop %v380
        %v382 = vadd.f32 %v375, 1.0
        %v383 = vadd.f32 %v377, 1.0
        %v384 = vadd.f32 %v379, 1.0
        %v385 = vadd.f32 %v381, 1.0
        %v386 = vrcp.pop %v382
        %v387 = vmul.f32 1.0, %v386
        %v388 = vrcp.pop %v383
        %v389 = vmul.f32 1.0, %v388
        %v390 = vrcp.pop %v384
        %v391 = vmul.f32 1.0, %v390
        %v392 = vrcp.pop %v385
        %v393 = vmul.f32 1.0, %v392
        %v394 = vrot.slane %v387, 4
        %v395 = vadd.f32 %v387, %v394
        %v396 = vrot.slane %v395, 2
        %v397 = vadd.f32 %v395, %v396
        %v398 = vrot.slane %v397, 1
        %v399 = vadd.f32 %v397, %v398
        %v400 = vrot.slane %v389, 4
        %v401 = vadd.f32 %v389, %v400
        %v402 = vrot.slane %v401, 2
        %v403 = vadd.f32 %v401, %v402
        %v404 = vrot.slane %v403, 1
        %v405 = vadd.f32 %v403, %v404
        %v406 = vrot.slane %v391, 4
        %v407 = vadd.f32 %v391, %v406
        %v408 = vrot.slane %v407, 2
        %v409 = vadd.f32 %v407, %v408
        %v410 = vrot.slane %v409, 1
        %v411 = vadd.f32 %v409, %v410
        %v412 = vrot.slane %v393, 4
        %v413 = vadd.f32 %v393, %v412
        %v414 = vrot.slane %v413, 2
        %v415 = vadd.f32 %v413, %v414
        %v416 = vrot.slane %v415, 1
        %v417 = vadd.f32 %v415, %v416
        %v418 = vmul.f32 %v387, %v387
        %v419 = vmul.f32 %v389, %v389
        %v420 = vmul.f32 %v391, %v391
        %v421 = vmul.f32 %v393, %v393
        %v422 = vrot.slane %v418, 4
        %v423 = vadd.f32 %v418, %v422
        %v424 = vrot.slane %v423, 2
        %v425 = vadd.f32 %v423, %v424
        %v426 = vrot.slane %v425, 1
        %v427 = vadd.f32 %v425, %v426
        %v428 = vrot.slane %v419, 4
        %v429 = vadd.f32 %v419, %v428
        %v430 = vrot.slane %v429, 2
        %v431 = vadd.f32 %v429, %v430
        %v432 = vrot.slane %v431, 1
        %v433 = vadd.f32 %v431, %v432
        %v434 = vrot.slane %v420, 4
        %v435 = vadd.f32 %v420, %v434
        %v436 = vrot.slane %v435, 2
        %v437 = vadd.f32 %v435, %v436
        %v438 = vrot.slane %v437, 1
        %v439 = vadd.f32 %v437, %v438
        %v440 = vrot.slane %v421, 4
        %v441 = vadd.f32 %v421, %v440
        %v442 = vrot.slane %v441, 2
        %v443 = vadd.f32 %v441, %v442
        %v444 = vrot.slane %v443, 1
        %v445 = vadd.f32 %v443, %v444
        %v446 = vmul.f32 %v399, 0.125
        %v447 = vmul.f32 %v405, 0.125
        %v448 = vmul.f32 %v411, 0.125
        %v449 = vmul.f32 %v417, 0.125
        %v450 = vmul.f32 %v427, 0.125
        %v451 = vmul.f32 %v433, 0.125
        %v452 = vmul.f32 %v439, 0.125
        %v453 = vmul.f32 %v445, 0.125
        %v454 = vmul.f32 %v446, %v446
        %v455 = vmul.f32 %v447, %v447
        %v456 = vmul.f32 %v448, %v448
        %v457 = vmul.f32 %v449, %v449
        %v458 = vsub.f32 %v450, %v454
        %v459 = vsub.f32 %v451, %v455
        %v460 = vsub.f32 %v452, %v456
        %v461 = vsub.f32 %v453, %v457
        %v462 = vadd.f32 %v458, 1e-05
        %v463 = vadd.f32 %v459, 1e-05
        %v464 = vadd.f32 %v460, 1e-05
        %v465 = vadd.f32 %v461, 1e-05
        %v466 = vrsqrt.pop %v462
        %v467 = vrsqrt.pop %v463
        %v468 = vrsqrt.pop %v464
        %v469 = vrsqrt.pop %v465
        %v470 = vsub.f32 0.0, %v446
        %v471 = vsub.f32 0.0, %v447
        %v472 = vsub.f32 0.0, %v448
        %v473 = vsub.f32 0.0, %v449
        %v474 = vmul.f32 %v470, %v466
        %v475 = vmul.f32 %v471, %v467
        %v476 = vmul.f32 %v472, %v468
        %v477 = vmul.f32 %v473, %v469
        %v478 = vmul.f32 %v387, %v466
        %v479 = vmul.f32 %v389, %v467
        %v480 = vmul.f32 %v391, %v468
        %v481 = vmul.f32 %v393, %v469
        %v482 = vadd.f32 %v478, %v474
        %v483 = vadd.f32 %v479, %v475
        %v484 = vadd.f32 %v480, %v476
        %v485 = vadd.f32 %v481, %v477
        %v486 = vlaneseq
        %v487 = vshrl.u32 %v486, 7
        %v488 = vsub.s32 0, %v487
        %v489 = vrot.slane %v258, %v488
        %490 = vmatprep.subr.mxu0 0.0
        %491 = vmatpush1.msra.mxu0 %v239
        %492 = vmatprep.subr.mxu0 0.0
        %493 = vmatpush1.msra.mxu0 %v238
        %494 = vmatprep.subr.mxu0 0.0
        %495 = vmatpush1.msra.mxu0 %v237
        %496 = vmatprep.subr.mxu0 0.0
        %497 = vmatpush1.msra.mxu0 %v236
        %498 = vmatprep.subr.mxu0 0.0
        %499 = vmatpush1.msra.mxu0 %v235
        %500 = vmatprep.subr.mxu0 0.0
        %501 = vmatpush1.msra.mxu0 %v234
        %502 = vmatprep.subr.mxu0 0.0
        %503 = vmatpush1.msra.mxu0 %v233
        %504 = vmatprep.subr.mxu0 0.0
        %505 = vmatpush1.msra.mxu0 %v232
        %506 = vmatprep.subr.mxu0 0.0
        %507 = vmatpush1.msra.mxu0 %v231
        %508 = vmatprep.subr.mxu0 0.0
        %509 = vmatpush1.msra.mxu0 %v230
        %510 = vmatprep.subr.mxu0 0.0
        %511 = vmatpush1.msra.mxu0 %v229
        %512 = vmatprep.subr.mxu0 0.0
        %513 = vmatpush1.msra.mxu0 %v228
        %514 = vmatprep.subr.mxu0 0.0
        %515 = vmatpush1.msra.mxu0 %v227
        %516 = vmatprep.subr.mxu0 0.0
        %517 = vmatpush1.msra.mxu0 %v226
        %518 = vmatprep.subr.mxu0 0.0
        %519 = vmatpush1.msra.mxu0 %v225
        %520 = vmatprep.subr.mxu0 0.0
        %521 = vmatpush1.msra.mxu0 %v224
        %522 = vmatprep.subr.mxu0 0.0
        %523 = vmatpush2.msra.mxu0 0.0
        %524 = vmatprep.subr.mxu0 0.0
        %525 = vmatpush2.msra.mxu0 0.0
        %526 = vmatprep.subr.mxu0 0.0
        %527 = vmatpush2.msra.mxu0 0.0
        %528 = vmatprep.subr.mxu0 0.0
        %529 = vmatpush2.msra.mxu0 0.0
        %530 = vmatprep.subr.mxu0 0.0
        %531 = vmatpush2.msra.mxu0 0.0
        %532 = vmatprep.subr.mxu0 0.0
        %533 = vmatpush2.msra.mxu0 0.0
        %534 = vmatprep.subr.mxu0 0.0
        %535 = vmatpush2.msra.mxu0 0.0
        %536 = vmatprep.subr.mxu0 0.0
        %537 = vmatpush2.msra.mxu0 0.0
        %538 = vmatprep.subr.mxu0 0.0
        %539 = vmatpush2.msra.mxu0 0.0
        %540 = vmatprep.subr.mxu0 0.0
        %541 = vmatpush2.msra.mxu0 0.0
        %542 = vmatprep.subr.mxu0 0.0
        %543 = vmatpush2.msra.mxu0 0.0
        %544 = vmatprep.subr.mxu0 0.0
        %545 = vmatpush2.msra.mxu0 0.0
        %546 = vmatprep.subr.mxu0 0.0
        %547 = vmatpush2.msra.mxu0 0.0
        %548 = vmatprep.subr.mxu0 0.0
        %549 = vmatpush2.msra.mxu0 0.0
        %550 = vmatprep.subr.mxu0 0.0
        %551 = vmatpush2.msra.mxu0 0.0
        %552 = vmatprep.subr.mxu0 0.0
        %553 = vmatpush2.msra.mxu0 0.0
        %554 = vmatprep.mubr.f32.mxu0 0.0
        %555 = vmatmul.mubr.f32.gmra.mxu0 %v482
        %v556 = vpop.f32.mrf.mxu0
        %v557 = vadd.f32 %v489, %v556
        %v558 = vpop.f32.mrf.mxu0
        %559 = vmatprep.mubr.f32.mxu0 0.0
        %560 = vmatmul.mubr.f32.gmra.mxu0 %v483
        %v561 = vpop.f32.mrf.mxu0
        %v562 = vadd.f32 %v489, %v561
        %v563 = vpop.f32.mrf.mxu0
        %564 = vmatprep.mubr.f32.mxu0 0.0
        %565 = vmatmul.mubr.f32.gmra.mxu0 %v484
        %v566 = vpop.f32.mrf.mxu0
        %v567 = vadd.f32 %v489, %v566
        %v568 = vpop.f32.mrf.mxu0
        %569 = vmatprep.mubr.f32.mxu0 0.0
        %570 = vmatmul.mubr.f32.gmra.mxu0 %v485
        %v571 = vpop.f32.mrf.mxu0
        %v572 = vadd.f32 %v489, %v571
        %v573 = vpop.f32.mrf.mxu0
        %574 = vdwg.mxu0
        %v575 = vxor.u32 %v557, 2147483648
        %v576 = vxor.u32 %v562, 2147483648
        %v577 = vxor.u32 %v567, 2147483648
        %v578 = vxor.u32 %v572, 2147483648
        %v579 = vmul.f32 %v575, 1.442695
        %v580 = vpow.pop %v579
        %v581 = vmul.f32 %v576, 1.442695
        %v582 = vpow.pop %v581
        %v583 = vmul.f32 %v577, 1.442695
        %v584 = vpow.pop %v583
        %v585 = vmul.f32 %v578, 1.442695
        %v586 = vpow.pop %v585
        %v587 = vadd.f32 %v580, 1.0
        %v588 = vadd.f32 %v582, 1.0
        %v589 = vadd.f32 %v584, 1.0
        %v590 = vadd.f32 %v586, 1.0
        %v591 = vrcp.pop %v587
        %v592 = vmul.f32 1.0, %v591
        %v593 = vrcp.pop %v588
        %v594 = vmul.f32 1.0, %v593
        %v595 = vrcp.pop %v589
        %v596 = vmul.f32 1.0, %v595
        %v597 = vrcp.pop %v590
        %v598 = vmul.f32 1.0, %v597
        %v599 = vrot.slane %v592, 4
        %v600 = vadd.f32 %v592, %v599
        %v601 = vrot.slane %v600, 2
        %v602 = vadd.f32 %v600, %v601
        %v603 = vrot.slane %v602, 1
        %v604 = vadd.f32 %v602, %v603
        %v605 = vrot.slane %v594, 4
        %v606 = vadd.f32 %v594, %v605
        %v607 = vrot.slane %v606, 2
        %v608 = vadd.f32 %v606, %v607
        %v609 = vrot.slane %v608, 1
        %v610 = vadd.f32 %v608, %v609
        %v611 = vrot.slane %v596, 4
        %v612 = vadd.f32 %v596, %v611
        %v613 = vrot.slane %v612, 2
        %v614 = vadd.f32 %v612, %v613
        %v615 = vrot.slane %v614, 1
        %v616 = vadd.f32 %v614, %v615
        %v617 = vrot.slane %v598, 4
        %v618 = vadd.f32 %v598, %v617
        %v619 = vrot.slane %v618, 2
        %v620 = vadd.f32 %v618, %v619
        %v621 = vrot.slane %v620, 1
        %v622 = vadd.f32 %v620, %v621
        %v623 = vmul.f32 %v592, %v592
        %v624 = vmul.f32 %v594, %v594
        %v625 = vmul.f32 %v596, %v596
        %v626 = vmul.f32 %v598, %v598
        %v627 = vrot.slane %v623, 4
        %v628 = vadd.f32 %v623, %v627
        %v629 = vrot.slane %v628, 2
        %v630 = vadd.f32 %v628, %v629
        %v631 = vrot.slane %v630, 1
        %v632 = vadd.f32 %v630, %v631
        %v633 = vrot.slane %v624, 4
        %v634 = vadd.f32 %v624, %v633
        %v635 = vrot.slane %v634, 2
        %v636 = vadd.f32 %v634, %v635
        %v637 = vrot.slane %v636, 1
        %v638 = vadd.f32 %v636, %v637
        %v639 = vrot.slane %v625, 4
        %v640 = vadd.f32 %v625, %v639
        %v641 = vrot.slane %v640, 2
        %v642 = vadd.f32 %v640, %v641
        %v643 = vrot.slane %v642, 1
        %v644 = vadd.f32 %v642, %v643
        %v645 = vrot.slane %v626, 4
        %v646 = vadd.f32 %v626, %v645
        %v647 = vrot.slane %v646, 2
        %v648 = vadd.f32 %v646, %v647
        %v649 = vrot.slane %v648, 1
        %v650 = vadd.f32 %v648, %v649
        %v651 = vmul.f32 %v604, 0.125
        %v652 = vmul.f32 %v610, 0.125
        %v653 = vmul.f32 %v616, 0.125
        %v654 = vmul.f32 %v622, 0.125
        %v655 = vmul.f32 %v632, 0.125
        %v656 = vmul.f32 %v638, 0.125
        %v657 = vmul.f32 %v644, 0.125
        %v658 = vmul.f32 %v650, 0.125
        %v659 = vmul.f32 %v651, %v651
        %v660 = vmul.f32 %v652, %v652
        %v661 = vmul.f32 %v653, %v653
        %v662 = vmul.f32 %v654, %v654
        %v663 = vsub.f32 %v655, %v659
        %v664 = vsub.f32 %v656, %v660
        %v665 = vsub.f32 %v657, %v661
        %v666 = vsub.f32 %v658, %v662
        %v667 = vadd.f32 %v663, 1e-05
        %v668 = vadd.f32 %v664, 1e-05
        %v669 = vadd.f32 %v665, 1e-05
        %v670 = vadd.f32 %v666, 1e-05
        %v671 = vrsqrt.pop %v667
        %v672 = vrsqrt.pop %v668
        %v673 = vrsqrt.pop %v669
        %v674 = vrsqrt.pop %v670
        %v675 = vsub.f32 0.0, %v651
        %v676 = vsub.f32 0.0, %v652
        %v677 = vsub.f32 0.0, %v653
        %v678 = vsub.f32 0.0, %v654
        %v679 = vmul.f32 %v675, %v671
        %v680 = vmul.f32 %v676, %v672
        %v681 = vmul.f32 %v677, %v673
        %v682 = vmul.f32 %v678, %v674
        %v683 = vmul.f32 %v592, %v671
        %v684 = vmul.f32 %v594, %v672
        %v685 = vmul.f32 %v596, %v673
        %v686 = vmul.f32 %v598, %v674
        %v687 = vadd.f32 %v683, %v679
        %v688 = vadd.f32 %v684, %v680
        %v689 = vadd.f32 %v685, %v681
        %v690 = vadd.f32 %v686, %v682
        %v691 = vlaneseq
        %v692 = vshrl.u32 %v691, 7
        %v693 = vsub.s32 0, %v692
        %v694 = vrot.slane %v259, %v693
        %695 = vmatprep.subr.mxu0 0.0
        %696 = vmatpush1.msra.mxu0 %v256
        %697 = vmatprep.subr.mxu0 0.0
        %698 = vmatpush1.msra.mxu0 %v255
        %699 = vmatprep.subr.mxu0 0.0
        %700 = vmatpush1.msra.mxu0 %v254
        %701 = vmatprep.subr.mxu0 0.0
        %702 = vmatpush1.msra.mxu0 %v253
        %703 = vmatprep.subr.mxu0 0.0
        %704 = vmatpush1.msra.mxu0 %v252
        %705 = vmatprep.subr.mxu0 0.0
        %706 = vmatpush1.msra.mxu0 %v251
        %707 = vmatprep.subr.mxu0 0.0
        %708 = vmatpush1.msra.mxu0 %v250
        %709 = vmatprep.subr.mxu0 0.0
        %710 = vmatpush1.msra.mxu0 %v249
        %711 = vmatprep.subr.mxu0 0.0
        %712 = vmatpush1.msra.mxu0 %v248
        %713 = vmatprep.subr.mxu0 0.0
        %714 = vmatpush1.msra.mxu0 %v247
        %715 = vmatprep.subr.mxu0 0.0
        %716 = vmatpush1.msra.mxu0 %v246
        %717 = vmatprep.subr.mxu0 0.0
        %718 = vmatpush1.msra.mxu0 %v245
        %719 = vmatprep.subr.mxu0 0.0
        %720 = vmatpush1.msra.mxu0 %v244
        %721 = vmatprep.subr.mxu0 0.0
        %722 = vmatpush1.msra.mxu0 %v243
        %723 = vmatprep.subr.mxu0 0.0
        %724 = vmatpush1.msra.mxu0 %v242
        %725 = vmatprep.subr.mxu0 0.0
        %726 = vmatpush1.msra.mxu0 %v241
        %727 = vmatprep.subr.mxu0 0.0
        %728 = vmatpush2.msra.mxu0 0.0
        %729 = vmatprep.subr.mxu0 0.0
        %730 = vmatpush2.msra.mxu0 0.0
        %731 = vmatprep.subr.mxu0 0.0
        %732 = vmatpush2.msra.mxu0 0.0
        %733 = vmatprep.subr.mxu0 0.0
        %734 = vmatpush2.msra.mxu0 0.0
        %735 = vmatprep.subr.mxu0 0.0
        %736 = vmatpush2.msra.mxu0 0.0
        %737 = vmatprep.subr.mxu0 0.0
        %738 = vmatpush2.msra.mxu0 0.0
        %739 = vmatprep.subr.mxu0 0.0
        %740 = vmatpush2.msra.mxu0 0.0
        %741 = vmatprep.subr.mxu0 0.0
        %742 = vmatpush2.msra.mxu0 0.0
        %743 = vmatprep.subr.mxu0 0.0
        %744 = vmatpush2.msra.mxu0 0.0
        %745 = vmatprep.subr.mxu0 0.0
        %746 = vmatpush2.msra.mxu0 0.0
        %747 = vmatprep.subr.mxu0 0.0
        %748 = vmatpush2.msra.mxu0 0.0
        %749 = vmatprep.subr.mxu0 0.0
        %750 = vmatpush2.msra.mxu0 0.0
        %751 = vmatprep.subr.mxu0 0.0
        %752 = vmatpush2.msra.mxu0 0.0
        %753 = vmatprep.subr.mxu0 0.0
        %754 = vmatpush2.msra.mxu0 0.0
        %755 = vmatprep.subr.mxu0 0.0
        %756 = vmatpush2.msra.mxu0 0.0
        %757 = vmatprep.subr.mxu0 0.0
        %758 = vmatpush2.msra.mxu0 0.0
        %759 = vmatprep.mubr.f32.mxu0 0.0
        %760 = vmatmul.mubr.f32.gmra.mxu0 %v687
        %v761 = vpop.f32.mrf.mxu0
        %v762 = vadd.f32 %v694, %v761
        %v763 = vpop.f32.mrf.mxu0
        %764 = vmatprep.mubr.f32.mxu0 0.0
        %765 = vmatmul.mubr.f32.gmra.mxu0 %v688
        %v766 = vpop.f32.mrf.mxu0
        %v767 = vadd.f32 %v694, %v766
        %v768 = vpop.f32.mrf.mxu0
        %769 = vmatprep.mubr.f32.mxu0 0.0
        %770 = vmatmul.mubr.f32.gmra.mxu0 %v689
        %v771 = vpop.f32.mrf.mxu0
        %v772 = vadd.f32 %v694, %v771
        %v773 = vpop.f32.mrf.mxu0
        %774 = vmatprep.mubr.f32.mxu0 0.0
        %775 = vmatmul.mubr.f32.gmra.mxu0 %v690
        %v776 = vpop.f32.mrf.mxu0
        %v777 = vadd.f32 %v694, %v776
        %v778 = vpop.f32.mrf.mxu0
        %779 = vdwg.mxu0
        %v780 = vtanh.pop %v762
        %v781 = vtanh.pop %v767
        %v782 = vtanh.pop %v772
        %v783 = vtanh.pop %v777
        %vm784 = vcmask 261120
        %785 = vst.msk [vmem:[%s215] sm:$0xff] %vm784, %v780
        %786 = vst.msk [vmem:[%s215 + $0x8] sm:$0xff] %vm784, %v781
        %787 = vst.msk [vmem:[%s215 + $0x10] sm:$0xff] %vm784, %v782
        %788 = vst.msk [vmem:[%s215 + $0x18] sm:$0xff] %vm784, %v783
        %s789 = sand.u32 %s97, 1
        %s790 = scalar_lea.sflag [#allocation4], %s789
        %s791 = sand.u32 %s97, 1
        %s792 = smul.addr %s791, 32
        %s793 = scalar_lea.vmem [#allocation8], %s792
        // Predicated region
        $region45: #{tpu_custom_call.1} parent=31 // pred_check
          %p794 = pneg %p107
        $region46: #{tpu_custom_call.1} parent=31 // pred_check_branch
          %796 = sbr.rel (%p794) target = $region48
        $region47: #{tpu_custom_call.1} parent=31 // pred_region
          %s797 = smul.u32 4, %s21
          %s799 = ssub.s32 512, 512
          %800 = vsyncadd %s790, %s799
          %s801 = smul.addr %s797, 128
          %s802 = scalar_lea.hbm %s3, %s801
          %s803 = sshll.u32 %s793, 4
          %s804 = int_to_ptr.vmem [resolvable:$true] %s803
          %809 = dma.vmem_to_hbm [thread:$0]  %s804, 512, %s802, %s790, 128, 128, 8
        $region48: #{tpu_custom_call.1} parent=31 // pred_fallthru
          _
      $region32: #{tpu_custom_call.1} parent=5 // pred_fallthru
        _
      %p810 = scmp.le.s32.totalorder 2, %s16
      // Predicated region
      $region49: #{tpu_custom_call.1} parent=5 // pred_check
        %p811 = pneg %p810
      $region50: #{tpu_custom_call.1} parent=5 // pred_check_branch
        %813 = sbr.rel (%p811) target = $region52
      $region51: #{tpu_custom_call.1} parent=5 // pred_region
        %s814 = ssub.s32 %s16, 2
        // Predicated region
        $region53: #{tpu_custom_call.1} parent=51 // pred_check
          %p815 = pneg %p113
        $region54: #{tpu_custom_call.1} parent=51 // pred_check_branch
          %817 = sbr.rel (%p815) target = $region56
        $region55: #{tpu_custom_call.1} parent=51 // pred_region
          %s818 = sand.u32 %s98, 1
          %s819 = scalar_lea.sflag [#allocation4], %s818
          %s820 = sand.u32 %s98, 1
          %s821 = smul.addr %s820, 32
          %s822 = scalar_lea.vmem [#allocation8], %s821
          %823 = dma.done %s819, 512
        $region56: #{tpu_custom_call.1} parent=51 // pred_fallthru
          _
      $region52: #{tpu_custom_call.1} parent=5 // pred_fallthru
        _
    $region6: #{tpu_custom_call.1} parent=1 // loop_footer
      %s20 = sadd.s32 1, %s16
    $region7: #{tpu_custom_call.1} parent=1 // loop_footer_branch
      %15 = sbr.rel target = $region3
    $region8: #{tpu_custom_call.1} parent=1 // loop_exit
      _
    %824 = vsyncpa [#allocation3], 1
    %s825 = scalar_lea.sflag [#allocation3], 1
    %826 = vsyncpa %s825, 1
    %827 = vsyncpa [#allocation6], 1
    %828 = vsyncpa [#allocation4], 1
    %s829 = scalar_lea.sflag [#allocation4], 1
    %830 = vsyncpa %s829, 1

</llo_original>
